<compile_context>
chip_gen: v7x
topology: tpu7x:2x2x1
jax: 0.10.0
libtpu: 0.0.40
codegen_flags: <defaults>
</compile_context>

<pallas_src>
import jax
import jax.numpy as jnp
from jax.experimental import pallas as pl
from jax.experimental.pallas import tpu as pltpu


def attention_kernel(s_ref, enc_ref, w_ref, out_ref):
    # s_ref:   (Sh, B, Dd)   decoder state (pre-repeat)
    # enc_ref: (S,  B, De)   encoder outputs, S == 2*Sh
    # w_ref:   (2, 1, Dmax)  packed fused weight (w2 @ w1):
    #                          row 0 = s-half   (first Dd lanes valid)
    #                          row 1 = enc-half (first De lanes valid)
    # out_ref: (B, S)        softmax(logits, dim=batch).transpose(0, 1)
    Sh, B, Dd = s_ref.shape
    S, _, De = enc_ref.shape

    ws = w_ref[0][:, :Dd].reshape(1, 1, Dd)   # offset-0 lane slice: free
    we = w_ref[1][:, :De].reshape(1, 1, De)

    # torch: a = tanh(cat(s.repeat(2,1,1), enc_output, dim=2)); fc2(fc1(a))
    # fused: logits[t, b] = sum_d tanh(x[t,b,d]) * w_eff[d]   (+ const bias,
    # dropped -- softmax over the batch axis is shift-invariant).
    # tanh(concat) == concat(tanh(.)), so the halves reduce independently and
    # the repeated s contribution is computed once for both copies.
    cs = jnp.sum(jnp.tanh(s_ref[...]) * ws, axis=-1)    # (Sh, B)
    ce = jnp.sum(jnp.tanh(enc_ref[...]) * we, axis=-1)  # (S,  B)
    logits = jnp.concatenate([cs, cs], axis=0) + ce     # (S,  B)

    # F.softmax(a, dim=1): softmax over the BATCH dimension of (S, B).
    m = jnp.max(logits, axis=1, keepdims=True)
    e = jnp.exp(logits - m)
    denom = jnp.sum(e, axis=1, keepdims=True)
    probs = e * pl.reciprocal(denom, approx=True)       # (S, B)

    # torch .transpose(0, 1) fused here: write (B, S) directly.
    out_ref[...] = probs.T


def fold_attention_params(w1, b1, w2, b2, dec_hid_dim, enc_hid_dim):
    """Fold fc2(fc1(.)) into a single weight vector.

    Runs ONCE per parameter update (hoisted out of the per-call path).
    The fused bias (w2 @ b1 + b2) is constant over the softmax axis and is
    dropped -- it has zero effect on the output.
    """
    del b1, b2
    w_eff = (w2 @ w1).reshape(-1).astype(jnp.float32)        # (Dd + De,)
    d_max = max(dec_hid_dim, enc_hid_dim)
    w_pack = jnp.zeros((2, 1, d_max), jnp.float32)
    w_pack = w_pack.at[0, 0, :dec_hid_dim].set(w_eff[:dec_hid_dim])
    w_pack = w_pack.at[1, 0, :enc_hid_dim].set(w_eff[dec_hid_dim:])
    return w_pack


def attention_forward(s, enc_output, w_pack):
    Sh, B, _ = s.shape
    S, _, _ = enc_output.shape
    assert S == 2 * Sh, "torch forward hard-codes s.repeat(2, 1, 1)"

    # Single-shot, grid-less call: whole problem (a few KB) lives in VMEM.
    # If S/B ever grow, reintroduce a grid over S marked "parallel" (v7x has
    # 2 TensorCores) and size tiles for 64 MiB (v7x) / 128 MiB (v5e/v6e) VMEM.
    return pl.pallas_call(
        attention_kernel,
        out_shape=jax.ShapeDtypeStruct((B, S), jnp.float32),
        in_specs=[
            pl.BlockSpec(memory_space=pltpu.MemorySpace.VMEM),
            pl.BlockSpec(memory_space=pltpu.MemorySpace.VMEM),
            pl.BlockSpec(memory_space=pltpu.MemorySpace.VMEM),
        ],
        out_specs=pl.BlockSpec(memory_space=pltpu.MemorySpace.VMEM),
    )(s, enc_output, w_pack)


def attention_reference(s, enc_output, w1, b1, w2, b2):
    """Pure-JAX reference mirroring the PyTorch forward exactly (with biases)."""
    s_rep = jnp.tile(s, (2, 1, 1))
    a = jnp.tanh(jnp.concatenate([s_rep, enc_output], axis=2))
    a = a @ w1.T + b1
    a = a @ w2.T + b2
    a = a[..., 0]
    return jax.nn.softmax(a, axis=1).T


if __name__ == "__main__":
    enc_hid_dim = 32
    dec_hid_dim = 32
    seq_len = 8
    batch = 4

    key = jax.random.PRNGKey(0)
    k1, k2, k3, k4, k5, k6 = jax.random.split(key, 6)

    # inputs (s has half the seq length; forward repeats it by 2 along dim 0)
    s = jax.random.normal(k1, (seq_len // 2, batch, dec_hid_dim), jnp.float32)
    enc_output = jax.random.normal(k2, (seq_len, batch, enc_hid_dim), jnp.float32)

    # deterministic parameter init (shapes from nn.Linear in __init__)
    fan1 = dec_hid_dim + enc_hid_dim
    lim1 = 1.0 / (fan1 ** 0.5)
    w1 = jax.random.uniform(k3, (dec_hid_dim, fan1), jnp.float32, -lim1, lim1)
    b1 = jax.random.uniform(k4, (dec_hid_dim,), jnp.float32, -lim1, lim1)
    lim2 = 1.0 / (dec_hid_dim ** 0.5)
    w2 = jax.random.uniform(k5, (1, dec_hid_dim), jnp.float32, -lim2, lim2)
    b2 = jax.random.uniform(k6, (1,), jnp.float32, -lim2, lim2)

    # One-time weight folding (per parameter update, not per attention call).
    w_pack = fold_attention_params(w1, b1, w2, b2, dec_hid_dim, enc_hid_dim)
    w_pack = jax.block_until_ready(w_pack)

    out = attention_forward(s, enc_output, w_pack)
    out = jax.block_until_ready(out)

    ref = attention_reference(s, enc_output, w1, b1, w2, b2)
    assert out.shape == (batch, seq_len)
    # rtol covers the EUP approx-reciprocal in the softmax; the dropped bias is
    # exactly invisible to the batch-axis softmax, and the fused-weight
    # reassociation is exact.
    assert jnp.allclose(out, ref, rtol=2e-3, atol=1e-5), "mismatch vs reference"

    print("KERNEL_OK")
</pallas_src>

<mosaic_0001>
module attributes {stable_mosaic.version = 11 : i64} {
  func.func @attention_kernel(%arg0: memref<4x4x32xf32, #tpu.memory_space<vmem>>, %arg1: memref<8x4x32xf32, #tpu.memory_space<vmem>>, %arg2: memref<2x1x32xf32, #tpu.memory_space<vmem>>, %arg3: memref<4x8xf32, #tpu.memory_space<vmem>>) attributes {dimension_semantics = [], scalar_prefetch = 0 : i64, scratch_operands = 0 : i64, tpu.core_type = #tpu.core_type<tc>} {
    %c0 = arith.constant 0 : index
    %c0_0 = arith.constant 0 : index
    %c0_1 = arith.constant 0 : index
    %0 = vector.load %arg2[%c0, %c0_0, %c0_1] : memref<2x1x32xf32, #tpu.memory_space<vmem>>, vector<1x1x32xf32>
    %1 = vector.shape_cast %0 : vector<1x1x32xf32> to vector<1x32xf32>
    %2 = vector.shape_cast %1 : vector<1x32xf32> to vector<1x1x32xf32>
    %c1 = arith.constant 1 : index
    %c0_2 = arith.constant 0 : index
    %c0_3 = arith.constant 0 : index
    %3 = vector.load %arg2[%c1, %c0_2, %c0_3] : memref<2x1x32xf32, #tpu.memory_space<vmem>>, vector<1x1x32xf32>
    %4 = vector.shape_cast %3 : vector<1x1x32xf32> to vector<1x32xf32>
    %5 = vector.shape_cast %4 : vector<1x32xf32> to vector<1x1x32xf32>
    %c0_4 = arith.constant 0 : index
    %c0_5 = arith.constant 0 : index
    %c0_6 = arith.constant 0 : index
    %6 = vector.load %arg0[%c0_4, %c0_5, %c0_6] : memref<4x4x32xf32, #tpu.memory_space<vmem>>, vector<4x4x32xf32>
    %7 = math.tanh %6 : vector<4x4x32xf32>
    %8 = vector.broadcast %2 : vector<1x1x32xf32> to vector<4x4x32xf32>
    %9 = arith.mulf %7, %8 : vector<4x4x32xf32>
    %cst = arith.constant dense<0.000000e+00> : vector<4x4xf32>
    %10 = vector.multi_reduction <add>, %9, %cst [2] : vector<4x4x32xf32> to vector<4x4xf32>
    %c0_7 = arith.constant 0 : index
    %c0_8 = arith.constant 0 : index
    %c0_9 = arith.constant 0 : index
    %11 = vector.load %arg1[%c0_7, %c0_8, %c0_9] : memref<8x4x32xf32, #tpu.memory_space<vmem>>, vector<8x4x32xf32>
    %12 = math.tanh %11 : vector<8x4x32xf32>
    %13 = vector.broadcast %5 : vector<1x1x32xf32> to vector<8x4x32xf32>
    %14 = arith.mulf %12, %13 : vector<8x4x32xf32>
    %cst_10 = arith.constant dense<0.000000e+00> : vector<8x4xf32>
    %15 = vector.multi_reduction <add>, %14, %cst_10 [2] : vector<8x4x32xf32> to vector<8x4xf32>
    %16 = tpu.concatenate %10, %10 in 0 : vector<4x4xf32>, vector<4x4xf32> -> vector<8x4xf32>
    %17 = arith.addf %16, %15 : vector<8x4xf32>
    %cst_11 = arith.constant dense<0xFF800000> : vector<8xf32>
    %18 = vector.multi_reduction <maximumf>, %17, %cst_11 [1] : vector<8x4xf32> to vector<8xf32>
    %19 = vector.shape_cast %18 : vector<8xf32> to vector<8x1xf32>
    %20 = vector.broadcast %19 : vector<8x1xf32> to vector<8x4xf32>
    %21 = arith.subf %17, %20 : vector<8x4xf32>
    %22 = math.exp %21 : vector<8x4xf32>
    %cst_12 = arith.constant dense<0.000000e+00> : vector<8xf32>
    %23 = vector.multi_reduction <add>, %22, %cst_12 [1] : vector<8x4xf32> to vector<8xf32>
    %24 = vector.shape_cast %23 : vector<8xf32> to vector<8x1xf32>
    %25 = tpu.reciprocal %24 {approx = true} : vector<8x1xf32> -> vector<8x1xf32>
    %26 = vector.broadcast %25 : vector<8x1xf32> to vector<8x4xf32>
    %27 = arith.mulf %22, %26 : vector<8x4xf32>
    %28 = tpu.transpose %27, [1, 0] : vector<8x4xf32> -> vector<4x8xf32>
    %c0_13 = arith.constant 0 : index
    %c0_14 = arith.constant 0 : index
    %29 = vector.load %arg3[%c0_13, %c0_14] : memref<4x8xf32, #tpu.memory_space<vmem>>, vector<4x8xf32>
    tpu.vector_store %arg3[%c0_13, %c0_14], %28 {strides = array<i32>} : memref<4x8xf32, #tpu.memory_space<vmem>>, vector<4x8xf32>,
    return
  }
}

</mosaic_0001>

<llo_original>
// kernel: tpu_custom_call.1
$region0: #{tpu_custom_call.1}
  #allocation0 [shape = 'u32[]', space=smem, size = 0x4, offset = 0x4, fixed_abs, tag = 'smem constant byte address 0x4 - core index']
  #allocation1 [shape = 'u32[144,128]{1,0:T(1,128)}', space=vmem, size = 0x12000, scoped, tag = 'internal scratch']
  %s0 = inlined_call_operand.hbm [shape: f32[4,4,32], index: 0, kind: input, shape index: {}]
  %s1 = inlined_call_operand.hbm [shape: f32[8,4,32], index: 1, kind: input, shape index: {}]
  %s2 = inlined_call_operand.vmem [shape: f32[2,1,32], index: 2, kind: input, shape index: {}]
  %s3 = inlined_call_operand.hbm [shape: f32[4,8], index: 3, kind: output, shape index: {}]
  %s4 = sld [smem:[#allocation0]]
  $region30: #{tpu_custom_call.1} parent=0
    _
  %s6 = ssub.s32 1, %s4
  %s7 = scalar_select 0, %s6, %s4
  $region1: #{tpu_custom_call.1} parent=0
    #allocation2 [shape = 'u8[8192]{0}', space=vmem, size = 0x2000, scoped, tag = 'input window, operand 0, single buffered']
    #allocation3 [shape = 's32[1]{0}', space=sflag, size = 0x4, scoped, tag = 'scoped memory for tpu_custom_call.1']
    #allocation4 [shape = 's32[1]{0}', space=sflag, size = 0x4, scoped, tag = 'scoped memory for tpu_custom_call.1']
    #allocation5 [shape = 'u8[16384]{0}', space=vmem, size = 0x4000, scoped, tag = 'input window, operand 1, single buffered']
    #allocation6 [shape = 's32[1]{0}', space=sflag, size = 0x4, scoped, tag = 'scoped memory for tpu_custom_call.1']
    #allocation7 [shape = 'u8[2048]{0}', space=vmem, size = 0x800, scoped, tag = 'output window, operand 0, single buffered']
    %8 = vsyncpa [#allocation3], 0
    %9 = vsyncpa [#allocation6], 0
    %10 = vsyncpa [#allocation4], 0
    // Predicated region
    $region2: #{tpu_custom_call.1} parent=1 // pred_check
      _
    $region3: #{tpu_custom_call.1} parent=1 // pred_check_branch
      %12 = sbr.rel (0) target = $region5
    $region4: #{tpu_custom_call.1} parent=1 // pred_region
      %s14 = ssub.s32 256, 256
      %15 = vsyncadd [#allocation3], %s14
      %s16 = sshll.u32 [#allocation2], 4
      %s17 = int_to_ptr.vmem [resolvable:$true] %s16
      %22 = dma.hbm_to_vmem [thread:$0]  %s0, 256, %s17, [#allocation3], 64, 64, 4
    $region5: #{tpu_custom_call.1} parent=1 // pred_fallthru
      _
    // Predicated region
    $region6: #{tpu_custom_call.1} parent=1 // pred_check
      _
    $region7: #{tpu_custom_call.1} parent=1 // pred_check_branch
      %24 = sbr.rel (0) target = $region9
    $region8: #{tpu_custom_call.1} parent=1 // pred_region
      %s26 = ssub.s32 512, 512
      %27 = vsyncadd [#allocation6], %s26
      %s28 = sshll.u32 [#allocation5], 4
      %s29 = int_to_ptr.vmem [resolvable:$true] %s28
      %34 = dma.hbm_to_vmem [thread:$0]  %s1, 512, %s29, [#allocation6], 64, 64, 4
    $region9: #{tpu_custom_call.1} parent=1 // pred_fallthru
      _
    // Predicated region
    $region10: #{tpu_custom_call.1} parent=1 // pred_check
      _
    $region11: #{tpu_custom_call.1} parent=1 // pred_check_branch
      %36 = sbr.rel (0) target = $region13
    $region12: #{tpu_custom_call.1} parent=1 // pred_region
      _
    $region13: #{tpu_custom_call.1} parent=1 // pred_fallthru
      _
    // Predicated region
    $region14: #{tpu_custom_call.1} parent=1 // pred_check
      _
    $region15: #{tpu_custom_call.1} parent=1 // pred_check_branch
      %38 = sbr.rel (0) target = $region17
    $region16: #{tpu_custom_call.1} parent=1 // pred_region
      %39 = dma.done [#allocation3], 256
    $region17: #{tpu_custom_call.1} parent=1 // pred_fallthru
      _
    // Predicated region
    $region18: #{tpu_custom_call.1} parent=1 // pred_check
      _
    $region19: #{tpu_custom_call.1} parent=1 // pred_check_branch
      %41 = sbr.rel (0) target = $region21
    $region20: #{tpu_custom_call.1} parent=1 // pred_region
      %42 = dma.done [#allocation6], 512
    $region21: #{tpu_custom_call.1} parent=1 // pred_fallthru
      _
    %v43 = vld [vmem:[%s2] sm:$0x1]
    %s44 = scalar_lea.vmem %s2, 1
    %v45 = vld [vmem:[%s44] sm:$0x1]
    %v46 = vld [vmem:[#allocation2] sm:$0xf]
    %v47 = vld [vmem:[#allocation2 + $0x4] sm:$0xf]
    %v48 = vld [vmem:[#allocation2 + $0x8] sm:$0xf]
    %v49 = vld [vmem:[#allocation2 + $0xc] sm:$0xf]
    %v50 = vtanh.pop %v46
    %v51 = vtanh.pop %v47
    %v52 = vtanh.pop %v48
    %v53 = vtanh.pop %v49
    %v55 = vlaneseq
    %v56 = vshrl.u32 %v55, 7
    %v57 = vsub.s32 0, %v56
    %v58 = vrot.slane %v43, %v57
    %v60 = vmul.f32 %v50, %v58
    %v61 = vmul.f32 %v51, %v58
    %v62 = vmul.f32 %v52, %v58
    %v63 = vmul.f32 %v53, %v58
    %vm64 = vcmask 257024
    %v65 = vsel %vm64, %v60, 0.0
    %66 = vadd.xlane.f32.xlu0 %v65
    %v67 = vpop.xlane.xlu0 %66
    %v68 = vsel %vm64, %v61, 0.0
    %69 = vadd.xlane.f32.xlu0 %v68
    %v70 = vpop.xlane.xlu0 %69
    %v71 = vsel %vm64, %v62, 0.0
    %72 = vadd.xlane.f32.xlu0 %v71
    %v73 = vpop.xlane.xlu0 %72
    %v74 = vsel %vm64, %v63, 0.0
    %75 = vadd.xlane.f32.xlu0 %v74
    %v76 = vpop.xlane.xlu0 %75
    %v77 = vld [vmem:[#allocation5] sm:$0xf]
    %v78 = vld [vmem:[#allocation5 + $0x4] sm:$0xf]
    %v79 = vld [vmem:[#allocation5 + $0x8] sm:$0xf]
    %v80 = vld [vmem:[#allocation5 + $0xc] sm:$0xf]
    %v81 = vld [vmem:[#allocation5 + $0x10] sm:$0xf]
    %v82 = vld [vmem:[#allocation5 + $0x14] sm:$0xf]
    %v83 = vld [vmem:[#allocation5 + $0x18] sm:$0xf]
    %v84 = vld [vmem:[#allocation5 + $0x1c] sm:$0xf]
    %v85 = vtanh.pop %v77
    %v86 = vtanh.pop %v78
    %v87 = vtanh.pop %v79
    %v88 = vtanh.pop %v80
    %v89 = vtanh.pop %v81
    %v90 = vtanh.pop %v82
    %v91 = vtanh.pop %v83
    %v92 = vtanh.pop %v84
    %v94 = vlaneseq
    %v95 = vshrl.u32 %v94, 7
    %v96 = vsub.s32 0, %v95
    %v97 = vrot.slane %v45, %v96
    %v99 = vmul.f32 %v85, %v97
    %v100 = vmul.f32 %v86, %v97
    %v101 = vmul.f32 %v87, %v97
    %v102 = vmul.f32 %v88, %v97
    %v103 = vmul.f32 %v89, %v97
    %v104 = vmul.f32 %v90, %v97
    %v105 = vmul.f32 %v91, %v97
    %v106 = vmul.f32 %v92, %v97
    %v107 = vsel %vm64, %v99, 0.0
    %108 = vadd.xlane.f32.xlu0 %v107
    %v109 = vpop.xlane.xlu0 %108
    %v110 = vsel %vm64, %v100, 0.0
    %111 = vadd.xlane.f32.xlu0 %v110
    %v112 = vpop.xlane.xlu0 %111
    %v113 = vsel %vm64, %v101, 0.0
    %114 = vadd.xlane.f32.xlu0 %v113
    %v115 = vpop.xlane.xlu0 %114
    %v116 = vsel %vm64, %v102, 0.0
    %117 = vadd.xlane.f32.xlu0 %v116
    %v118 = vpop.xlane.xlu0 %117
    %v119 = vsel %vm64, %v103, 0.0
    %120 = vadd.xlane.f32.xlu0 %v119
    %v121 = vpop.xlane.xlu0 %120
    %v122 = vsel %vm64, %v104, 0.0
    %123 = vadd.xlane.f32.xlu0 %v122
    %v124 = vpop.xlane.xlu0 %123
    %v125 = vsel %vm64, %v105, 0.0
    %126 = vadd.xlane.f32.xlu0 %v125
    %v127 = vpop.xlane.xlu0 %126
    %v128 = vsel %vm64, %v106, 0.0
    %129 = vadd.xlane.f32.xlu0 %v128
    %v130 = vpop.xlane.xlu0 %129
    %v135 = vlaneseq
    %v136 = vand.u32 %v135, 127
    %v137 = vlaneseq
    %v138 = vshrl.u32 %v137, 7
    %v139 = vsub.s32 %v136, %v138
    %v140 = vrot.slane %v67, %v139
    %v141 = vlaneseq
    %v142 = vshrl.u32 %v141, 7
    %v143 = vsub.s32 %v136, %v142
    %v144 = vrot.slane %v70, %v143
    %v145 = vlaneseq
    %v146 = vshrl.u32 %v145, 7
    %v147 = vsub.s32 %v136, %v146
    %v148 = vrot.slane %v73, %v147
    %v149 = vlaneseq
    %v150 = vshrl.u32 %v149, 7
    %v151 = vsub.s32 %v136, %v150
    %v152 = vrot.slane %v76, %v151
    %vm153 = vcmask 1041409
    %v154 = vsel %vm153, %v144, %v140
    %vm155 = vcmask 1042434
    %v156 = vsel %vm155, %v148, %v154
    %vm157 = vcmask 1043459
    %v158 = vsel %vm157, %v152, %v156
    %vm160 = vcmask 1045509
    %v161 = vsel %vm160, %v144, %v140
    %vm162 = vcmask 1046534
    %v163 = vsel %vm162, %v148, %v161
    %vm164 = vcmask 1047559
    %v165 = vsel %vm164, %v152, %v163
    %vm167 = vcmask 1043456
    %v168 = vsel %vm167, %v158, %v165
    %v177 = vlaneseq
    %v178 = vshrl.u32 %v177, 7
    %v179 = vsub.s32 %v136, %v178
    %v180 = vrot.slane %v109, %v179
    %v181 = vlaneseq
    %v182 = vshrl.u32 %v181, 7
    %v183 = vsub.s32 %v136, %v182
    %v184 = vrot.slane %v112, %v183
    %v185 = vlaneseq
    %v186 = vshrl.u32 %v185, 7
    %v187 = vsub.s32 %v136, %v186
    %v188 = vrot.slane %v115, %v187
    %v189 = vlaneseq
    %v190 = vshrl.u32 %v189, 7
    %v191 = vsub.s32 %v136, %v190
    %v192 = vrot.slane %v118, %v191
    %v193 = vlaneseq
    %v194 = vshrl.u32 %v193, 7
    %v195 = vsub.s32 %v136, %v194
    %v196 = vrot.slane %v121, %v195
    %v197 = vlaneseq
    %v198 = vshrl.u32 %v197, 7
    %v199 = vsub.s32 %v136, %v198
    %v200 = vrot.slane %v124, %v199
    %v201 = vlaneseq
    %v202 = vshrl.u32 %v201, 7
    %v203 = vsub.s32 %v136, %v202
    %v204 = vrot.slane %v127, %v203
    %v205 = vlaneseq
    %v206 = vshrl.u32 %v205, 7
    %v207 = vsub.s32 %v136, %v206
    %v208 = vrot.slane %v130, %v207
    %v209 = vsel %vm153, %v184, %v180
    %v210 = vsel %vm155, %v188, %v209
    %v211 = vsel %vm157, %v192, %v210
    %vm212 = vcmask 1044484
    %v213 = vsel %vm212, %v196, %v211
    %v214 = vsel %vm160, %v200, %v213
    %v215 = vsel %vm162, %v204, %v214
    %v216 = vsel %vm164, %v208, %v215
    %v218 = vadd.f32 %v168, %v216
    %vm219 = vcmask 31744
    %v220 = vsel %vm219, %v218, -inf
    %221 = vmax.xlane.f32.xlu0 %v220
    %v222 = vpop.xlane.xlu0 %221
    %v223 = vsub.f32 %v218, %v222
    %v224 = vmul.f32 %v223, 1.442695
    %v225 = vpow.pop %v224
    %v226 = vsel %vm219, %v225, 0.0
    %227 = vadd.xlane.f32.xlu0 %v226
    %v228 = vpop.xlane.xlu0 %227
    %v229 = vrcp.pop %v228
    %v230 = vmul.f32 %v225, %v229
    %231 = vxpose.xlu0.b32.start [1/16] %v230, 128
    %232 = vxpose.xlu0.b32.cont [2/16] 0.0, 128
    %233 = vxpose.xlu0.b32.cont [3/16] 0.0, 128
    %234 = vxpose.xlu0.b32.cont [4/16] 0.0, 128
    %235 = vxpose.xlu0.b32.cont [5/16] 0.0, 128
    %236 = vxpose.xlu0.b32.cont [6/16] 0.0, 128
    %237 = vxpose.xlu0.b32.cont [7/16] 0.0, 128
    %238 = vxpose.xlu0.b32.cont [8/16] 0.0, 128
    %239 = vxpose.xlu0.b32.cont [9/16] 0.0, 128
    %240 = vxpose.xlu0.b32.cont [10/16] 0.0, 128
    %241 = vxpose.xlu0.b32.cont [11/16] 0.0, 128
    %242 = vxpose.xlu0.b32.cont [12/16] 0.0, 128
    %243 = vxpose.xlu0.b32.cont [13/16] 0.0, 128
    %244 = vxpose.xlu0.b32.cont [14/16] 0.0, 128
    %245 = vxpose.xlu0.b32.cont [15/16] 0.0, 128
    %246 = vxpose.xlu0.b32.end [16/16] 0.0, 128
    %v247 = vpop.trf.xlu0
    %v248 = vpop.trf.xlu0
    %v249 = vpop.trf.xlu0
    %v250 = vpop.trf.xlu0
    %v251 = vpop.trf.xlu0
    %v252 = vpop.trf.xlu0
    %v253 = vpop.trf.xlu0
    %v254 = vpop.trf.xlu0
    %v255 = vpop.trf.xlu0
    %v256 = vpop.trf.xlu0
    %v257 = vpop.trf.xlu0
    %v258 = vpop.trf.xlu0
    %v259 = vpop.trf.xlu0
    %v260 = vpop.trf.xlu0
    %v261 = vpop.trf.xlu0
    %v262 = vpop.trf.xlu0
    %vm263 = vcmask 60416
    %264 = vst.msk [vmem:[#allocation7] sm:$0xf] %vm263, %v247
    // Predicated region
    $region22: #{tpu_custom_call.1} parent=1 // pred_check
      _
    $region23: #{tpu_custom_call.1} parent=1 // pred_check_branch
      %266 = sbr.rel (0) target = $region25
    $region24: #{tpu_custom_call.1} parent=1 // pred_region
      %s268 = ssub.s32 64, 64
      %269 = vsyncadd [#allocation4], %s268
      %s271 = sshll.u32 [#allocation7], 4
      %s272 = int_to_ptr.vmem [resolvable:$true] %s271
      %274 = dma.vmem_to_hbm [thread:$0]  %s272, 64, %s3, [#allocation4]
    $region25: #{tpu_custom_call.1} parent=1 // pred_fallthru
      _
    // Predicated region
    $region26: #{tpu_custom_call.1} parent=1 // pred_check
      _
    $region27: #{tpu_custom_call.1} parent=1 // pred_check_branch
      %276 = sbr.rel (0) target = $region29
    $region28: #{tpu_custom_call.1} parent=1 // pred_region
      %277 = dma.done [#allocation4], 64
    $region29: #{tpu_custom_call.1} parent=1 // pred_fallthru
      _
    %278 = vsyncpa [#allocation3], 1
    %279 = vsyncpa [#allocation6], 1
    %280 = vsyncpa [#allocation4], 1

</llo_original>
